<compile_context>
chip_gen: v6e
topology: v6e:2x2x1
jax: 0.10.0
libtpu: 0.0.40
codegen_flags: <defaults>
</compile_context>

<pallas_src>
import jax
import jax.numpy as jnp
from jax.experimental import pallas as pl
from jax.experimental.pallas import tpu as pltpu


def sin_poly2_kernel(x_ref, p_ref, o_ref):
    x = x_ref[...]            # (TN, TF)
    a = p_ref[0:1, :]         # (1, TF) — broadcasts over rows
    b = p_ref[1:2, :]
    c = p_ref[2:3, :]
    d = p_ref[3:4, :]
    # y = x*(a + b*x) + c*sin(d*x)
    o_ref[...] = x * (a + b * x) + c * jnp.sin(d * x)


def sin_poly2_params(x, a, b, c, d, *,
                     max_tile_n=4096,
                     max_tile_f=512,
                     target_block_bytes=2 * 1024 * 1024,
                     vmem_limit_bytes=48 * 1024 * 1024):
    N, F = x.shape
    assert a.shape == (1, F) and b.shape == (1, F)
    assert c.shape == (1, F) and d.shape == (1, F)

    # Pack the four per-feature parameter rows into a single (4, F) array:
    # one DMA / one BlockSpec instead of four tiny ones.
    params = jnp.concatenate([a, b, c, d], axis=0)  # (4, F)

    itemsize = jnp.dtype(x.dtype).itemsize

    # --- feature tiling: lane-dense multiples of 128 -------------------------
    Fp = pl.cdiv(F, 128) * 128
    tf = min(Fp, max_tile_f)
    Fp = pl.cdiv(Fp, tf) * tf                       # make tf divide padded F

    # --- row tiling: size each block to ~target_block_bytes ------------------
    tn = max(8, min(max_tile_n, target_block_bytes // (tf * itemsize)))
    tn = (tn // 8) * 8                              # sublane multiple
    n_pad8 = pl.cdiv(N, 8) * 8
    tn = min(tn, n_pad8)                            # don't over-pad tiny batches
    Np = pl.cdiv(N, tn) * tn

    # --- wrapper-side zero padding (replaces the divisibility assert) --------
    if (Np, Fp) != (N, F):
        x_p = jnp.zeros((Np, Fp), x.dtype).at[:N, :F].set(x)
    else:
        x_p = x
    if Fp != F:
        params_p = jnp.zeros((4, Fp), params.dtype).at[:, :F].set(params)
    else:
        params_p = params

    grid = (Np // tn, Fp // tf)
    x_spec = pl.BlockSpec((tn, tf), lambda i, j: (i, j))
    p_spec = pl.BlockSpec((4, tf), lambda i, j: (0, j))

    out = pl.pallas_call(
        sin_poly2_kernel,
        out_shape=jax.ShapeDtypeStruct((Np, Fp), x.dtype),
        grid_spec=pltpu.PrefetchScalarGridSpec(
            num_scalar_prefetch=0,
            grid=grid,
            in_specs=[x_spec, p_spec],
            out_specs=x_spec,
        ),
        compiler_params=pltpu.CompilerParams(
            dimension_semantics=("parallel", "parallel"),
            vmem_limit_bytes=vmem_limit_bytes,
        ),
    )(x_p, params_p)

    if (Np, Fp) != (N, F):
        out = out[:N, :F]
    return out


def sin_poly2_ref(x, a, b, c, d):
    return x * a + b * x**2 + c * jnp.sin(d * x)


if __name__ == "__main__":
    # Small shapes consistent with the module: x (batch, num_features)
    N, F = 8, 128
    key = jax.random.PRNGKey(0)
    kx, ka, kb, kc, kd = jax.random.split(key, 5)

    x = jax.random.normal(kx, (N, F), dtype=jnp.float32)

    # Deterministic param init matching the module defaults:
    #   a ~ N(0, 0.01), b ~ N(0, 0.01), c ~ N(1, 0.01), d ~ N(1, 0.01)
    a = 0.0 + 0.01 * jax.random.normal(ka, (1, F), dtype=jnp.float32)
    b = 0.0 + 0.01 * jax.random.normal(kb, (1, F), dtype=jnp.float32)
    c = 1.0 + 0.01 * jax.random.normal(kc, (1, F), dtype=jnp.float32)
    d = 1.0 + 0.01 * jax.random.normal(kd, (1, F), dtype=jnp.float32)

    out = sin_poly2_params(x, a, b, c, d)
    out = jax.block_until_ready(out)

    ref = sin_poly2_ref(x, a, b, c, d)
    assert out.shape == x.shape and out.dtype == x.dtype
    assert jnp.allclose(out, ref, atol=1e-5, rtol=1e-5)

    # Also exercise a non-divisible batch to verify the padded-grid path.
    N2 = 37
    x2 = jax.random.normal(kx, (N2, F), dtype=jnp.float32)
    out2 = jax.block_until_ready(sin_poly2_params(x2, a, b, c, d))
    assert jnp.allclose(out2, sin_poly2_ref(x2, a, b, c, d), atol=1e-5, rtol=1e-5)

    print("KERNEL_OK")
</pallas_src>

<mosaic_0001>
module attributes {stable_mosaic.version = 11 : i64} {
  func.func @sin_poly2_kernel(%arg0: i32, %arg1: i32, %arg2: memref<8x128xf32, #tpu.memory_space<vmem>>, %arg3: memref<4x128xf32, #tpu.memory_space<vmem>>, %arg4: memref<8x128xf32, #tpu.memory_space<vmem>>) attributes {dimension_semantics = [#tpu.dimension_semantics<parallel>, #tpu.dimension_semantics<parallel>], iteration_bounds = array<i64: 1, 1>, scalar_prefetch = 0 : i64, scratch_operands = 0 : i64, tpu.core_type = #tpu.core_type<tc>, window_params = [{transform_indices = @transform_0, window_bounds = array<i64: 8, 128>}, {transform_indices = @transform_1, window_bounds = array<i64: 4, 128>}, {transform_indices = @transform_2, window_bounds = array<i64: 8, 128>}]} {
    %c0 = arith.constant 0 : index
    %c0_0 = arith.constant 0 : index
    %0 = vector.load %arg2[%c0, %c0_0] : memref<8x128xf32, #tpu.memory_space<vmem>>, vector<8x128xf32>
    %c0_1 = arith.constant 0 : index
    %c0_2 = arith.constant 0 : index
    %1 = vector.load %arg3[%c0_1, %c0_2] : memref<4x128xf32, #tpu.memory_space<vmem>>, vector<1x128xf32>
    %c1 = arith.constant 1 : index
    %c0_3 = arith.constant 0 : index
    %2 = vector.load %arg3[%c1, %c0_3] : memref<4x128xf32, #tpu.memory_space<vmem>>, vector<1x128xf32>
    %c2 = arith.constant 2 : index
    %c0_4 = arith.constant 0 : index
    %3 = vector.load %arg3[%c2, %c0_4] : memref<4x128xf32, #tpu.memory_space<vmem>>, vector<1x128xf32>
    %c3 = arith.constant 3 : index
    %c0_5 = arith.constant 0 : index
    %4 = vector.load %arg3[%c3, %c0_5] : memref<4x128xf32, #tpu.memory_space<vmem>>, vector<1x128xf32>
    %5 = vector.broadcast %2 : vector<1x128xf32> to vector<8x128xf32>
    %6 = arith.mulf %5, %0 : vector<8x128xf32>
    %7 = vector.broadcast %1 : vector<1x128xf32> to vector<8x128xf32>
    %8 = arith.addf %7, %6 : vector<8x128xf32>
    %9 = arith.mulf %0, %8 : vector<8x128xf32>
    %10 = vector.broadcast %4 : vector<1x128xf32> to vector<8x128xf32>
    %11 = arith.mulf %10, %0 : vector<8x128xf32>
    %12 = math.sin %11 : vector<8x128xf32>
    %13 = vector.broadcast %3 : vector<1x128xf32> to vector<8x128xf32>
    %14 = arith.mulf %13, %12 : vector<8x128xf32>
    %15 = arith.addf %9, %14 : vector<8x128xf32>
    %c0_6 = arith.constant 0 : index
    %c0_7 = arith.constant 0 : index
    %16 = vector.load %arg4[%c0_6, %c0_7] : memref<8x128xf32, #tpu.memory_space<vmem>>, vector<8x128xf32>
    tpu.vector_store %arg4[%c0_6, %c0_7], %15 {strides = array<i32>} : memref<8x128xf32, #tpu.memory_space<vmem>>, vector<8x128xf32>,
    return
  }
  func.func @transform_0(%arg0: i32, %arg1: i32) -> (i32, i32) {
    %c0_i32 = arith.constant 0 : i32
    return %arg0, %arg1 : i32, i32
  }
  func.func @transform_1(%arg0: i32, %arg1: i32) -> (i32, i32) {
    %c0_i32 = arith.constant 0 : i32
    %c0_i32_0 = arith.constant 0 : i32
    return %c0_i32, %arg1 : i32, i32
  }
  func.func @transform_2(%arg0: i32, %arg1: i32) -> (i32, i32) {
    %c0_i32 = arith.constant 0 : i32
    return %arg0, %arg1 : i32, i32
  }
}

</mosaic_0001>

<llo_original>
// kernel: tpu_custom_call.1
$region0: #{tpu_custom_call.1}
  #allocation0 [shape = 'u32[]', space=smem, size = 0x4, offset = 0x4, fixed_abs, tag = 'smem constant byte address 0x4 - core index']
  #allocation1 [shape = 'u32[144,128]{1,0:T(1,128)}', space=vmem, size = 0x12000, scoped, tag = 'internal scratch']
  %s0 = inlined_call_operand.hbm [shape: f32[8,128], index: 0, kind: input, shape index: {}]
  %s1 = inlined_call_operand.hbm [shape: f32[4,128], index: 1, kind: input, shape index: {}]
  %s2 = inlined_call_operand.hbm [shape: f32[8,128], index: 2, kind: output, shape index: {}]
  %s3 = sld [smem:[#allocation0]]
  $region26: #{tpu_custom_call.1} parent=0
    _
  %s5 = ssub.s32 1, %s3
  %s6 = scalar_select 0, %s5, %s3
  $region1: #{tpu_custom_call.1} parent=0
    #allocation2 [shape = 'u8[4096]{0}', space=vmem, size = 0x1000, scoped, tag = 'input window, operand 0, single buffered']
    #allocation3 [shape = 's32[1]{0}', space=sflag, size = 0x4, scoped, tag = 'scoped memory for tpu_custom_call.1']
    #allocation4 [shape = 's32[1]{0}', space=sflag, size = 0x4, scoped, tag = 'scoped memory for tpu_custom_call.1']
    #allocation5 [shape = 'u8[2048]{0}', space=vmem, size = 0x800, scoped, tag = 'input window, operand 1, single buffered']
    #allocation6 [shape = 's32[1]{0}', space=sflag, size = 0x4, scoped, tag = 'scoped memory for tpu_custom_call.1']
    #allocation7 [shape = 'u8[4096]{0}', space=vmem, size = 0x1000, scoped, tag = 'output window, operand 0, single buffered']
    %7 = vsyncpa [#allocation3], 0
    %8 = vsyncpa [#allocation6], 0
    %9 = vsyncpa [#allocation4], 0
    // Predicated region
    $region2: #{tpu_custom_call.1} parent=1 // pred_check
      _
    $region3: #{tpu_custom_call.1} parent=1 // pred_check_branch
      %11 = sbr.rel (0) target = $region5
    $region4: #{tpu_custom_call.1} parent=1 // pred_region
      %s13 = ssub.s32 128, 128
      %14 = vsyncadd [#allocation3], %s13
      %s16 = sshll.u32 [#allocation2], 4
      %s17 = int_to_ptr.vmem [resolvable:$true] %s16
      %19 = dma.hbm_to_vmem [thread:$0]  %s0, 128, %s17, [#allocation3]
    $region5: #{tpu_custom_call.1} parent=1 // pred_fallthru
      _
    // Predicated region
    $region6: #{tpu_custom_call.1} parent=1 // pred_check
      _
    $region7: #{tpu_custom_call.1} parent=1 // pred_check_branch
      %21 = sbr.rel (0) target = $region9
    $region8: #{tpu_custom_call.1} parent=1 // pred_region
      %s23 = ssub.s32 64, 64
      %24 = vsyncadd [#allocation6], %s23
      %s26 = sshll.u32 [#allocation5], 4
      %s27 = int_to_ptr.vmem [resolvable:$true] %s26
      %29 = dma.hbm_to_vmem [thread:$0]  %s1, 64, %s27, [#allocation6]
    $region9: #{tpu_custom_call.1} parent=1 // pred_fallthru
      _
    // Predicated region
    $region10: #{tpu_custom_call.1} parent=1 // pred_check
      _
    $region11: #{tpu_custom_call.1} parent=1 // pred_check_branch
      %31 = sbr.rel (0) target = $region13
    $region12: #{tpu_custom_call.1} parent=1 // pred_region
      %32 = dma.done [#allocation3], 128
    $region13: #{tpu_custom_call.1} parent=1 // pred_fallthru
      _
    // Predicated region
    $region14: #{tpu_custom_call.1} parent=1 // pred_check
      _
    $region15: #{tpu_custom_call.1} parent=1 // pred_check_branch
      %34 = sbr.rel (0) target = $region17
    $region16: #{tpu_custom_call.1} parent=1 // pred_region
      %35 = dma.done [#allocation6], 64
    $region17: #{tpu_custom_call.1} parent=1 // pred_fallthru
      _
    %v36 = vld [vmem:[#allocation2] sm:$0xff]
    %v37 = vld [vmem:[#allocation5] sm:$0x1]
    %v38 = vld [vmem:[#allocation5 + $0x1] sm:$0x1]
    %v39 = vld [vmem:[#allocation5 + $0x2] sm:$0x1]
    %v40 = vld [vmem:[#allocation5 + $0x3] sm:$0x1]
    %v41 = vlaneseq
    %v42 = vshrl.u32 %v41, 7
    %v43 = vsub.s32 0, %v42
    %v44 = vrot.slane %v38, %v43
    %v45 = vmul.f32 %v44, %v36
    %v46 = vlaneseq
    %v47 = vshrl.u32 %v46, 7
    %v48 = vsub.s32 0, %v47
    %v49 = vrot.slane %v37, %v48
    %v50 = vadd.f32 %v49, %v45
    %v51 = vmul.f32 %v36, %v50
    %v52 = vlaneseq
    %v53 = vshrl.u32 %v52, 7
    %v54 = vsub.s32 0, %v53
    %v55 = vrot.slane %v40, %v54
    %v56 = vmul.f32 %v55, %v36
    %v57 = vand.u32 2147483647, %v56
    %vm58 = vcmp.le.f32.partialorder %v57, 0.7853982
    %vm59 = vcmp.lt.s32.totalorder %v56, 0
    %v60 = vand.u32 %v56, 2139095040
    %v61 = vshrl.u32 %v60, 23
    %v62 = vsub.s32 %v61, 127
    %v63 = vand.u32 2147483647, %v56
    %v64 = vand.u32 %v63, 8388607
    %v65 = vor.u32 %v64, 8388608
    %v66 = vsub.s32 0, %v65
    %v67 = vadd.s32 %v62, 1
    %vm68 = vcmp.gt.s32.totalorder %v67, 0
    %v69 = vsel %vm68, %v67, 0
    %v70 = vshrl.u32 %v69, 5
    %v71 = vand.u32 %v69, 31
    %v72 = vsub.s32 32, %v71
    %v73 = vshrl.u32 683565275, %v72
    %v74 = vshll.u32 683565275, %v71
    %v75 = vshrl.u32 2475754826, %v72
    %v76 = vor.u32 %v74, %v75
    %v77 = vshll.u32 2475754826, %v71
    %v78 = vshrl.u32 2131351028, %v72
    %v79 = vor.u32 %v77, %v78
    %v80 = vshll.u32 2131351028, %v71
    %v81 = vshrl.u32 2102212464, %v72
    %v82 = vor.u32 %v80, %v81
    %v83 = vshll.u32 2102212464, %v71
    %v84 = vshrl.u32 920167782, %v72
    %v85 = vor.u32 %v83, %v84
    %v86 = vshll.u32 920167782, %v71
    %v87 = vshrl.u32 1326507024, %v72
    %v88 = vor.u32 %v86, %v87
    %vm89 = vcmp.lt.s32.totalorder %v70, 1
    %vm90 = vcmp.lt.s32.totalorder %v70, 2
    %vm91 = vcmp.lt.s32.totalorder %v70, 3
    %vm92 = vcmp.lt.s32.totalorder %v70, 4
    %v93 = vsel %vm89, %v73, %v76
    %v94 = vsel %vm92, %v82, 2102212464
    %v95 = vsel %vm91, %v79, %v94
    %v96 = vsel %vm90, %v93, %v95
    %v97 = vsel %vm89, %v76, %v79
    %v98 = vsel %vm92, %v85, 920167782
    %v99 = vsel %vm91, %v82, %v98
    %v100 = vsel %vm90, %v97, %v99
    %v101 = vsel %vm89, %v79, %v82
    %v102 = vsel %vm92, %v88, 1326507024
    %v103 = vsel %vm91, %v85, %v102
    %v104 = vsel %vm90, %v101, %v103
    %v105 = vshll.u32 %v65, 8
    %v106 = vmul.u32.u64.compose %v105, %v104
    %v107 = vextract.low.u32 %v106
    %v108 = vextract.high.u32 %v106
    %v109 = vmul.u32.u64.compose %v105, %v100
    %v110 = vextract.low.u32 %v109
    %v111 = vextract.high.u32 %v109
    %v112 = vmul.u32 %v105, %v96
    %v113 = vadd.s32 %v108, %v110
    %vm114 = vc.u32 %v108, %v110
    %v115 = vadd.s32 %v111, 1
    %v116 = vsel %vm114, %v115, %v111
    %v117 = vadd.s32 %v112, %v116
    %v118 = vadd.s32 %v117, 536870912
    %v119 = vshrl.u32 %v118, 30
    %v120 = vshll.u32 %v119, 30
    %v121 = vsub.s32 %v117, %v120
    %vm122 = vcmp.lt.s32.totalorder %v121, 0
    %v123 = vsub.s32 0, %v121
    %v124 = vsel %vm122, %v123, %v121
    %v125 = vclz %v124
    %v126 = vsub.s32 %v125, 2
    %vm127 = vcmp.gt.s32.totalorder 0, %v126
    %v128 = vsel %vm127, 0, %v126
    %v129 = vsub.s32 32, %v128
    %v130 = vshll.u32 %v121, %v128
    %v131 = vshrl.u32 %v113, %v129
    %v132 = vor.u32 %v130, %v131
    %v133 = vsub.s32 4294967266, %v128
    %v134 = vadd.s32 %v133, 127
    %v135 = vshll.u32 %v134, 23
    %v136 = vor.u32 4788187, %v135
    %v137 = vand.u32 2147483647, %v136
    %v139 = vcvt.s32.f32 %v132
    %v140 = vmul.f32 %v139, %v137
    %v141 = vxor.u32 %v140, 2147483648
    %v142 = vsel %vm59, %v141, %v140
    %v143 = vsub.s32 4, %v119
    %v144 = vsel %vm59, %v143, %v119
    %v145 = vsel %vm58, %v56, %v142
    %v146 = vsel %vm58, 0, %v144
    %v147 = vcosq.f32.pop %v145
    %v148 = vsinq.f32.pop %v145
    %vm149 = vweird.f32 %v56
    %v150 = vadd.s32 %v146, 3
    %v151 = vand.u32 %v150, 3
    %vm152 = vcmp.lt.s32.totalorder %v151, 2
    %vm153 = vcmp.eq.s32.totalorder %v151, 0
    %v154 = vxor.u32 %v148, 2147483648
    %v155 = vsel %vm153, %v147, %v154
    %vm156 = vcmp.eq.s32.totalorder %v151, 2
    %v157 = vxor.u32 %v147, 2147483648
    %v158 = vsel %vm156, %v157, %v148
    %v159 = vsel %vm152, %v155, %v158
    %v160 = vsel %vm149, nan, %v159
    %v161 = vlaneseq
    %v162 = vshrl.u32 %v161, 7
    %v163 = vsub.s32 0, %v162
    %v164 = vrot.slane %v39, %v163
    %v165 = vmul.f32 %v164, %v160
    %v166 = vadd.f32 %v51, %v165
    %167 = vst [vmem:[#allocation7] sm:$0xff] %v166
    // Predicated region
    $region18: #{tpu_custom_call.1} parent=1 // pred_check
      _
    $region19: #{tpu_custom_call.1} parent=1 // pred_check_branch
      %169 = sbr.rel (0) target = $region21
    $region20: #{tpu_custom_call.1} parent=1 // pred_region
      %s171 = ssub.s32 128, 128
      %172 = vsyncadd [#allocation4], %s171
      %s174 = sshll.u32 [#allocation7], 4
      %s175 = int_to_ptr.vmem [resolvable:$true] %s174
      %177 = dma.vmem_to_hbm [thread:$0]  %s175, 128, %s2, [#allocation4]
    $region21: #{tpu_custom_call.1} parent=1 // pred_fallthru
      _
    // Predicated region
    $region22: #{tpu_custom_call.1} parent=1 // pred_check
      _
    $region23: #{tpu_custom_call.1} parent=1 // pred_check_branch
      %179 = sbr.rel (0) target = $region25
    $region24: #{tpu_custom_call.1} parent=1 // pred_region
      %180 = dma.done [#allocation4], 128
    $region25: #{tpu_custom_call.1} parent=1 // pred_fallthru
      _
    %181 = vsyncpa [#allocation3], 1
    %182 = vsyncpa [#allocation6], 1
    %183 = vsyncpa [#allocation4], 1

</llo_original>
